<compile_context>
chip_gen: v5e
topology: v5e:2x2
jax: 0.10.0
libtpu: 0.0.40
codegen_flags: <defaults>
</compile_context>

<pallas_src>
import jax
import jax.numpy as jnp
from jax.experimental import pallas as pl
from jax.experimental.pallas import tpu as pltpu

BN_EPS = 1e-5
LANES = 128  # lane width; output dim is padded to this for unmasked stores


# ----------------------------------------------------------------------------- kernel
def binary_model_kernel(x_ref, w_stack_ref, w45_ref, vec_ref, out_ref):
    """One replica's full MLP.

    Shapes seen by the kernel (leading replica axis squeezed away by the BlockSpecs):
      x_ref       [B, D]        f32
      w_stack_ref [3, D, D]     bf16 (or f32)  -- stacked w1/w2/w3
      w45_ref     [D, 128]      bf16 (or f32)  -- folded w4@w5, zero-padded lanes
      vec_ref     [8, 128]      f32            -- rows 0..5: g1,be1,g2,be2,g3,be3
                                                  row 6: folded bias b45 (padded)
      out_ref     [B, 128]      f32            -- lane-dense output slab
    """
    D = x_ref.shape[-1]
    wdt = w_stack_ref.dtype
    h = x_ref[...].astype(jnp.float32)

    for i in range(3):
        # Linear (bias omitted: cancelled exactly by training-mode BN's mean
        # subtraction). bf16 operands -> single-pass MXU, f32 accumulation.
        h = jnp.dot(h.astype(wdt), w_stack_ref[i],
                    preferred_element_type=jnp.float32)

        # BatchNorm1d training-mode stats, one pass over h (f32):
        #   mean = E[h], var = E[h^2] - E[h]^2 (biased)
        mean = jnp.mean(h, axis=0, keepdims=True)
        ms = jnp.mean(h * h, axis=0, keepdims=True)
        var = jnp.maximum(ms - mean * mean, 0.0)   # guard tiny negative fp residue

        # Fused normalize + affine: one FMA per element.
        g = vec_ref[2 * i: 2 * i + 1, 0:D]          # [1, D]
        be = vec_ref[2 * i + 1: 2 * i + 2, 0:D]     # [1, D]
        scale = g * jax.lax.rsqrt(var + BN_EPS)
        shift = be - mean * scale
        h = jnp.maximum(h * scale + shift, 0.0)     # ReLU

    # Folded (Linear(D,O) -> Linear(O,O)); padded lanes carry zeros.
    b45 = vec_ref[6:7, :]                           # [1, 128]
    out_ref[...] = (jnp.dot(h.astype(wdt), w45_ref[...],
                            preferred_element_type=jnp.float32)
                    + b45).astype(out_ref.dtype)


# ----------------------------------------------------------------------- param packing
def init_params(key, input_dim, output_dim):
    """Deterministic synthetic parameters (shapes match the PyTorch module)."""
    ks = jax.random.split(key, 10)
    p = {}
    s_in = 1.0 / jnp.sqrt(jnp.float32(input_dim))
    s_out = 1.0 / jnp.sqrt(jnp.float32(output_dim))
    for i in range(3):
        p[f"w{i+1}"] = jax.random.normal(ks[2 * i], (input_dim, input_dim), jnp.float32) * s_in
        p[f"b{i+1}"] = jax.random.normal(ks[2 * i + 1], (1, input_dim), jnp.float32) * s_in
        p[f"g{i+1}"] = jnp.ones((1, input_dim), jnp.float32)      # BN weight
        p[f"be{i+1}"] = jnp.zeros((1, input_dim), jnp.float32)    # BN bias
    p["w4"] = jax.random.normal(ks[6], (input_dim, output_dim), jnp.float32) * s_in
    p["b4"] = jax.random.normal(ks[7], (1, output_dim), jnp.float32) * s_in
    p["w5"] = jax.random.normal(ks[8], (output_dim, output_dim), jnp.float32) * s_out
    p["b5"] = jax.random.normal(ks[9], (1, output_dim), jnp.float32) * s_out
    return p


def pack_params(p, matmul_dtype=jnp.bfloat16):
    """Collapse one model's parameters into 3 kernel operands."""
    input_dim = p["w1"].shape[0]
    output_dim = p["w4"].shape[1]
    assert input_dim <= LANES and output_dim <= LANES, "pack assumes dims <= 128 lanes"

    # Stacked hidden-layer weights.
    w_stack = jnp.stack([p["w1"], p["w2"], p["w3"]]).astype(matmul_dtype)  # [3, D, D]

    # Fold the two trailing Linear layers:  h@w4+b4 -> (.)@w5+b5  ==  h@(w4@w5) + (b4@w5+b5)
    w45 = jnp.dot(p["w4"], p["w5"], preferred_element_type=jnp.float32)            # [D, O]
    b45 = jnp.dot(p["b4"], p["w5"], preferred_element_type=jnp.float32) + p["b5"]  # [1, O]
    w45_pad = (jnp.zeros((input_dim, LANES), jnp.float32)
               .at[:, :output_dim].set(w45).astype(matmul_dtype))                  # [D, 128]

    # One vreg-sized pack for all small vectors: BN gamma/beta x3 + folded bias.
    vec = jnp.zeros((8, LANES), jnp.float32)
    for i in range(3):
        vec = vec.at[2 * i, :input_dim].set(p[f"g{i+1}"][0])
        vec = vec.at[2 * i + 1, :input_dim].set(p[f"be{i+1}"][0])
    vec = vec.at[6, :output_dim].set(b45[0])                                       # [8, 128]

    return w_stack, w45_pad, vec


# ---------------------------------------------------------------------------- wrappers
def binary_model_forward_replicated(xs, param_list, matmul_dtype=jnp.bfloat16):
    """Run R independent BinaryModels (e.g. CV folds) in one pallas_call.

    xs: [R, B, D] f32;  param_list: list of R parameter dicts.  Returns [R, B, O] f32.
    """
    R, B, D = xs.shape
    output_dim = param_list[0]["w4"].shape[1]

    packs = [pack_params(p, matmul_dtype) for p in param_list]
    w_stack = jnp.stack([pk[0] for pk in packs])   # [R, 3, D, D]
    w45 = jnp.stack([pk[1] for pk in packs])       # [R, D, 128]
    vec = jnp.stack([pk[2] for pk in packs])       # [R, 8, 128]

    def rep(tail):
        # One replica per grid step; leading axis squeezed out of the kernel Ref.
        return pl.BlockSpec((None,) + tail, lambda r: (r,) + (0,) * len(tail))

    out = pl.pallas_call(
        binary_model_kernel,
        out_shape=jax.ShapeDtypeStruct((R, B, LANES), jnp.float32),
        grid=(R,),
        in_specs=[rep((B, D)),          # xs
                  rep((3, D, D)),       # stacked hidden weights
                  rep((D, LANES)),      # folded tail weight (lane-padded)
                  rep((8, LANES))],     # BN/bias vector pack
        out_specs=rep((B, LANES)),
        compiler_params=pltpu.CompilerParams(dimension_semantics=("parallel",)),
    )(xs, w_stack, w45, vec)

    return out[:, :, :output_dim]


def binary_model_forward(x, p, matmul_dtype=jnp.bfloat16):
    """Single-model forward, matching BinaryModel.forward: x [B, D] -> [B, O]."""
    return binary_model_forward_replicated(x[None], [p], matmul_dtype)[0]


# --------------------------------------------------------------------------- references
def reference_forward(x, p):
    """Pure-JAX f32 reference matching PyTorch semantics exactly (biases included)."""
    h = x.astype(jnp.float32)
    for i in range(3):
        h = h @ p[f"w{i+1}"] + p[f"b{i+1}"]
        mean = jnp.mean(h, axis=0, keepdims=True)
        var = jnp.mean((h - mean) ** 2, axis=0, keepdims=True)
        h = (h - mean) / jnp.sqrt(var + BN_EPS)
        h = h * p[f"g{i+1}"] + p[f"be{i+1}"]
        h = jnp.maximum(h, 0.0)
    h = h @ p["w4"] + p["b4"]
    h = h @ p["w5"] + p["b5"]
    return h


def reference_forward_kernel_math(x, p, matmul_dtype=jnp.bfloat16):
    """Pure-JAX replica of the kernel's exact arithmetic (same packed operands,
    bf16 matmuls with f32 accumulation, folded tail, one-pass BN). Used for a
    tight-tolerance check of the bf16 path."""
    w_stack, w45_pad, vec = pack_params(p, matmul_dtype)
    D = p["w1"].shape[0]
    output_dim = p["w4"].shape[1]
    h = x.astype(jnp.float32)
    for i in range(3):
        h = jnp.dot(h.astype(matmul_dtype), w_stack[i], preferred_element_type=jnp.float32)
        mean = jnp.mean(h, axis=0, keepdims=True)
        ms = jnp.mean(h * h, axis=0, keepdims=True)
        var = jnp.maximum(ms - mean * mean, 0.0)
        scale = vec[2 * i: 2 * i + 1, :D] * jax.lax.rsqrt(var + BN_EPS)
        shift = vec[2 * i + 1: 2 * i + 2, :D] - mean * scale
        h = jnp.maximum(h * scale + shift, 0.0)
    out = jnp.dot(h.astype(matmul_dtype), w45_pad, preferred_element_type=jnp.float32) + vec[6:7, :]
    return out[:, :output_dim]


# --------------------------------------------------------------------------------- main
if __name__ == "__main__":
    B, INPUT_DIM, OUTPUT_DIM, R = 8, 32, 8, 2   # R = independent models (CV folds)

    key = jax.random.PRNGKey(0)
    kx, *kps = jax.random.split(key, 1 + R)
    xs = jax.random.normal(kx, (R, B, INPUT_DIM), jnp.float32)
    params_list = [init_params(kp, INPUT_DIM, OUTPUT_DIM) for kp in kps]

    # Default (bf16-MXU) path.
    out_bf16 = jax.block_until_ready(
        binary_model_forward_replicated(xs, params_list))
    # f32 path: validates the fused structure (bias cancellation, w4@w5 fold,
    # one-pass BN) exactly against the PyTorch-semantics reference.
    out_f32 = jax.block_until_ready(
        binary_model_forward_replicated(xs, params_list, matmul_dtype=jnp.float32))

    assert out_bf16.shape == (R, B, OUTPUT_DIM)
    assert out_f32.shape == (R, B, OUTPUT_DIM)

    for r in range(R):
        ref_f32 = reference_forward(xs[r], params_list[r])
        ref_bf16 = reference_forward_kernel_math(xs[r], params_list[r])
        assert jnp.allclose(out_f32[r], ref_f32, atol=1e-4, rtol=1e-4), \
            "f32-path mismatch vs PyTorch-semantics reference"
        assert jnp.allclose(out_bf16[r], ref_bf16, atol=1e-3, rtol=1e-3), \
            "bf16-path mismatch vs kernel-math reference"

    print("KERNEL_OK")
</pallas_src>

<mosaic_0001>
module attributes {stable_mosaic.version = 11 : i64} {
  func.func @binary_model_kernel(%arg0: i32, %arg1: memref<1x8x32xf32, #tpu.memory_space<vmem>>, %arg2: memref<1x3x32x32xbf16, #tpu.memory_space<vmem>>, %arg3: memref<1x32x128xbf16, #tpu.memory_space<vmem>>, %arg4: memref<1x8x128xf32, #tpu.memory_space<vmem>>, %arg5: memref<1x8x128xf32, #tpu.memory_space<vmem>>) attributes {dimension_semantics = [#tpu.dimension_semantics<parallel>], iteration_bounds = array<i64: 2>, scalar_prefetch = 0 : i64, scratch_operands = 0 : i64, tpu.core_type = #tpu.core_type<tc>, window_params = [{transform_indices = @transform_0, window_bounds = array<i64: 1, 8, 32>}, {transform_indices = @transform_1, window_bounds = array<i64: 1, 3, 32, 32>}, {transform_indices = @transform_2, window_bounds = array<i64: 1, 32, 128>}, {transform_indices = @transform_3, window_bounds = array<i64: 1, 8, 128>}, {transform_indices = @transform_4, window_bounds = array<i64: 1, 8, 128>}]} {
    %c0 = arith.constant 0 : index
    %c0_0 = arith.constant 0 : index
    %c0_1 = arith.constant 0 : index
    %0 = vector.load %arg1[%c0, %c0_0, %c0_1] : memref<1x8x32xf32, #tpu.memory_space<vmem>>, vector<1x8x32xf32>
    %1 = vector.shape_cast %0 : vector<1x8x32xf32> to vector<8x32xf32>
    %2 = arith.truncf %1 : vector<8x32xf32> to vector<8x32xbf16>
    %c0_2 = arith.constant 0 : index
    %c0_3 = arith.constant 0 : index
    %c0_4 = arith.constant 0 : index
    %c0_5 = arith.constant 0 : index
    %3 = vector.load %arg2[%c0_2, %c0_3, %c0_4, %c0_5] : memref<1x3x32x32xbf16, #tpu.memory_space<vmem>>, vector<1x1x32x32xbf16>
    %4 = vector.shape_cast %3 : vector<1x1x32x32xbf16> to vector<32x32xbf16>
    %cst = arith.constant dense<0.000000e+00> : vector<8x32xf32>
    %5 = tpu.matmul %2, %4, %cst {dimension_numbers = #tpu.dot_dimension_numbers<[1], [0], [0], [1], [0, 0, 1, 1], [], []>} : vector<8x32xbf16>, vector<32x32xbf16>, vector<8x32xf32> -> vector<8x32xf32>
    %cst_6 = arith.constant dense<0.000000e+00> : vector<32xf32>
    %6 = vector.multi_reduction <add>, %5, %cst_6 [0] : vector<8x32xf32> to vector<32xf32>
    %7 = vector.shape_cast %6 : vector<32xf32> to vector<1x32xf32>
    %cst_7 = arith.constant 8.000000e+00 : f32
    %8 = vector.broadcast %cst_7 : f32 to vector<1x32xf32>
    %9 = arith.divf %7, %8 : vector<1x32xf32>
    %10 = arith.mulf %5, %5 : vector<8x32xf32>
    %cst_8 = arith.constant dense<0.000000e+00> : vector<32xf32>
    %11 = vector.multi_reduction <add>, %10, %cst_8 [0] : vector<8x32xf32> to vector<32xf32>
    %12 = vector.shape_cast %11 : vector<32xf32> to vector<1x32xf32>
    %cst_9 = arith.constant 8.000000e+00 : f32
    %13 = vector.broadcast %cst_9 : f32 to vector<1x32xf32>
    %14 = arith.divf %12, %13 : vector<1x32xf32>
    %15 = arith.mulf %9, %9 : vector<1x32xf32>
    %16 = arith.subf %14, %15 : vector<1x32xf32>
    %cst_10 = arith.constant 0.000000e+00 : f32
    %17 = vector.broadcast %cst_10 : f32 to vector<1x32xf32>
    %18 = arith.maximumf %16, %17 : vector<1x32xf32>
    %c0_11 = arith.constant 0 : index
    %c0_12 = arith.constant 0 : index
    %c0_13 = arith.constant 0 : index
    %19 = vector.load %arg4[%c0_11, %c0_12, %c0_13] : memref<1x8x128xf32, #tpu.memory_space<vmem>>, vector<1x1x32xf32>
    %20 = vector.shape_cast %19 : vector<1x1x32xf32> to vector<1x32xf32>
    %c0_14 = arith.constant 0 : index
    %c1 = arith.constant 1 : index
    %c0_15 = arith.constant 0 : index
    %21 = vector.load %arg4[%c0_14, %c1, %c0_15] : memref<1x8x128xf32, #tpu.memory_space<vmem>>, vector<1x1x32xf32>
    %22 = vector.shape_cast %21 : vector<1x1x32xf32> to vector<1x32xf32>
    %cst_16 = arith.constant 9.99999974E-6 : f32
    %23 = vector.broadcast %cst_16 : f32 to vector<1x32xf32>
    %24 = arith.addf %18, %23 : vector<1x32xf32>
    %25 = math.rsqrt %24 : vector<1x32xf32>
    %26 = arith.mulf %20, %25 : vector<1x32xf32>
    %27 = arith.mulf %9, %26 : vector<1x32xf32>
    %28 = arith.subf %22, %27 : vector<1x32xf32>
    %29 = vector.broadcast %26 : vector<1x32xf32> to vector<8x32xf32>
    %30 = arith.mulf %5, %29 : vector<8x32xf32>
    %31 = vector.broadcast %28 : vector<1x32xf32> to vector<8x32xf32>
    %32 = arith.addf %30, %31 : vector<8x32xf32>
    %cst_17 = arith.constant 0.000000e+00 : f32
    %33 = vector.broadcast %cst_17 : f32 to vector<8x32xf32>
    %34 = arith.maximumf %32, %33 : vector<8x32xf32>
    %35 = arith.truncf %34 : vector<8x32xf32> to vector<8x32xbf16>
    %c0_18 = arith.constant 0 : index
    %c1_19 = arith.constant 1 : index
    %c0_20 = arith.constant 0 : index
    %c0_21 = arith.constant 0 : index
    %36 = vector.load %arg2[%c0_18, %c1_19, %c0_20, %c0_21] : memref<1x3x32x32xbf16, #tpu.memory_space<vmem>>, vector<1x1x32x32xbf16>
    %37 = vector.shape_cast %36 : vector<1x1x32x32xbf16> to vector<32x32xbf16>
    %cst_22 = arith.constant dense<0.000000e+00> : vector<8x32xf32>
    %38 = tpu.matmul %35, %37, %cst_22 {dimension_numbers = #tpu.dot_dimension_numbers<[1], [0], [0], [1], [0, 0, 1, 1], [], []>} : vector<8x32xbf16>, vector<32x32xbf16>, vector<8x32xf32> -> vector<8x32xf32>
    %cst_23 = arith.constant dense<0.000000e+00> : vector<32xf32>
    %39 = vector.multi_reduction <add>, %38, %cst_23 [0] : vector<8x32xf32> to vector<32xf32>
    %40 = vector.shape_cast %39 : vector<32xf32> to vector<1x32xf32>
    %cst_24 = arith.constant 8.000000e+00 : f32
    %41 = vector.broadcast %cst_24 : f32 to vector<1x32xf32>
    %42 = arith.divf %40, %41 : vector<1x32xf32>
    %43 = arith.mulf %38, %38 : vector<8x32xf32>
    %cst_25 = arith.constant dense<0.000000e+00> : vector<32xf32>
    %44 = vector.multi_reduction <add>, %43, %cst_25 [0] : vector<8x32xf32> to vector<32xf32>
    %45 = vector.shape_cast %44 : vector<32xf32> to vector<1x32xf32>
    %cst_26 = arith.constant 8.000000e+00 : f32
    %46 = vector.broadcast %cst_26 : f32 to vector<1x32xf32>
    %47 = arith.divf %45, %46 : vector<1x32xf32>
    %48 = arith.mulf %42, %42 : vector<1x32xf32>
    %49 = arith.subf %47, %48 : vector<1x32xf32>
    %cst_27 = arith.constant 0.000000e+00 : f32
    %50 = vector.broadcast %cst_27 : f32 to vector<1x32xf32>
    %51 = arith.maximumf %49, %50 : vector<1x32xf32>
    %c0_28 = arith.constant 0 : index
    %c2 = arith.constant 2 : index
    %c0_29 = arith.constant 0 : index
    %52 = vector.load %arg4[%c0_28, %c2, %c0_29] : memref<1x8x128xf32, #tpu.memory_space<vmem>>, vector<1x1x32xf32>
    %53 = vector.shape_cast %52 : vector<1x1x32xf32> to vector<1x32xf32>
    %c0_30 = arith.constant 0 : index
    %c3 = arith.constant 3 : index
    %c0_31 = arith.constant 0 : index
    %54 = vector.load %arg4[%c0_30, %c3, %c0_31] : memref<1x8x128xf32, #tpu.memory_space<vmem>>, vector<1x1x32xf32>
    %55 = vector.shape_cast %54 : vector<1x1x32xf32> to vector<1x32xf32>
    %cst_32 = arith.constant 9.99999974E-6 : f32
    %56 = vector.broadcast %cst_32 : f32 to vector<1x32xf32>
    %57 = arith.addf %51, %56 : vector<1x32xf32>
    %58 = math.rsqrt %57 : vector<1x32xf32>
    %59 = arith.mulf %53, %58 : vector<1x32xf32>
    %60 = arith.mulf %42, %59 : vector<1x32xf32>
    %61 = arith.subf %55, %60 : vector<1x32xf32>
    %62 = vector.broadcast %59 : vector<1x32xf32> to vector<8x32xf32>
    %63 = arith.mulf %38, %62 : vector<8x32xf32>
    %64 = vector.broadcast %61 : vector<1x32xf32> to vector<8x32xf32>
    %65 = arith.addf %63, %64 : vector<8x32xf32>
    %cst_33 = arith.constant 0.000000e+00 : f32
    %66 = vector.broadcast %cst_33 : f32 to vector<8x32xf32>
    %67 = arith.maximumf %65, %66 : vector<8x32xf32>
    %68 = arith.truncf %67 : vector<8x32xf32> to vector<8x32xbf16>
    %c0_34 = arith.constant 0 : index
    %c2_35 = arith.constant 2 : index
    %c0_36 = arith.constant 0 : index
    %c0_37 = arith.constant 0 : index
    %69 = vector.load %arg2[%c0_34, %c2_35, %c0_36, %c0_37] : memref<1x3x32x32xbf16, #tpu.memory_space<vmem>>, vector<1x1x32x32xbf16>
    %70 = vector.shape_cast %69 : vector<1x1x32x32xbf16> to vector<32x32xbf16>
    %cst_38 = arith.constant dense<0.000000e+00> : vector<8x32xf32>
    %71 = tpu.matmul %68, %70, %cst_38 {dimension_numbers = #tpu.dot_dimension_numbers<[1], [0], [0], [1], [0, 0, 1, 1], [], []>} : vector<8x32xbf16>, vector<32x32xbf16>, vector<8x32xf32> -> vector<8x32xf32>
    %cst_39 = arith.constant dense<0.000000e+00> : vector<32xf32>
    %72 = vector.multi_reduction <add>, %71, %cst_39 [0] : vector<8x32xf32> to vector<32xf32>
    %73 = vector.shape_cast %72 : vector<32xf32> to vector<1x32xf32>
    %cst_40 = arith.constant 8.000000e+00 : f32
    %74 = vector.broadcast %cst_40 : f32 to vector<1x32xf32>
    %75 = arith.divf %73, %74 : vector<1x32xf32>
    %76 = arith.mulf %71, %71 : vector<8x32xf32>
    %cst_41 = arith.constant dense<0.000000e+00> : vector<32xf32>
    %77 = vector.multi_reduction <add>, %76, %cst_41 [0] : vector<8x32xf32> to vector<32xf32>
    %78 = vector.shape_cast %77 : vector<32xf32> to vector<1x32xf32>
    %cst_42 = arith.constant 8.000000e+00 : f32
    %79 = vector.broadcast %cst_42 : f32 to vector<1x32xf32>
    %80 = arith.divf %78, %79 : vector<1x32xf32>
    %81 = arith.mulf %75, %75 : vector<1x32xf32>
    %82 = arith.subf %80, %81 : vector<1x32xf32>
    %cst_43 = arith.constant 0.000000e+00 : f32
    %83 = vector.broadcast %cst_43 : f32 to vector<1x32xf32>
    %84 = arith.maximumf %82, %83 : vector<1x32xf32>
    %c0_44 = arith.constant 0 : index
    %c4 = arith.constant 4 : index
    %c0_45 = arith.constant 0 : index
    %85 = vector.load %arg4[%c0_44, %c4, %c0_45] : memref<1x8x128xf32, #tpu.memory_space<vmem>>, vector<1x1x32xf32>
    %86 = vector.shape_cast %85 : vector<1x1x32xf32> to vector<1x32xf32>
    %c0_46 = arith.constant 0 : index
    %c5 = arith.constant 5 : index
    %c0_47 = arith.constant 0 : index
    %87 = vector.load %arg4[%c0_46, %c5, %c0_47] : memref<1x8x128xf32, #tpu.memory_space<vmem>>, vector<1x1x32xf32>
    %88 = vector.shape_cast %87 : vector<1x1x32xf32> to vector<1x32xf32>
    %cst_48 = arith.constant 9.99999974E-6 : f32
    %89 = vector.broadcast %cst_48 : f32 to vector<1x32xf32>
    %90 = arith.addf %84, %89 : vector<1x32xf32>
    %91 = math.rsqrt %90 : vector<1x32xf32>
    %92 = arith.mulf %86, %91 : vector<1x32xf32>
    %93 = arith.mulf %75, %92 : vector<1x32xf32>
    %94 = arith.subf %88, %93 : vector<1x32xf32>
    %95 = vector.broadcast %92 : vector<1x32xf32> to vector<8x32xf32>
    %96 = arith.mulf %71, %95 : vector<8x32xf32>
    %97 = vector.broadcast %94 : vector<1x32xf32> to vector<8x32xf32>
    %98 = arith.addf %96, %97 : vector<8x32xf32>
    %cst_49 = arith.constant 0.000000e+00 : f32
    %99 = vector.broadcast %cst_49 : f32 to vector<8x32xf32>
    %100 = arith.maximumf %98, %99 : vector<8x32xf32>
    %c0_50 = arith.constant 0 : index
    %c6 = arith.constant 6 : index
    %c0_51 = arith.constant 0 : index
    %101 = vector.load %arg4[%c0_50, %c6, %c0_51] : memref<1x8x128xf32, #tpu.memory_space<vmem>>, vector<1x1x128xf32>
    %102 = vector.shape_cast %101 : vector<1x1x128xf32> to vector<1x128xf32>
    %103 = arith.truncf %100 : vector<8x32xf32> to vector<8x32xbf16>
    %c0_52 = arith.constant 0 : index
    %c0_53 = arith.constant 0 : index
    %c0_54 = arith.constant 0 : index
    %104 = vector.load %arg3[%c0_52, %c0_53, %c0_54] : memref<1x32x128xbf16, #tpu.memory_space<vmem>>, vector<1x32x128xbf16>
    %105 = vector.shape_cast %104 : vector<1x32x128xbf16> to vector<32x128xbf16>
    %cst_55 = arith.constant dense<0.000000e+00> : vector<8x128xf32>
    %106 = tpu.matmul %103, %105, %cst_55 {dimension_numbers = #tpu.dot_dimension_numbers<[1], [0], [0], [1], [0, 0, 1, 1], [], []>} : vector<8x32xbf16>, vector<32x128xbf16>, vector<8x128xf32> -> vector<8x128xf32>
    %107 = vector.broadcast %102 : vector<1x128xf32> to vector<8x128xf32>
    %108 = arith.addf %106, %107 : vector<8x128xf32>
    %c0_56 = arith.constant 0 : index
    %c0_57 = arith.constant 0 : index
    %c0_58 = arith.constant 0 : index
    %109 = vector.load %arg5[%c0_56, %c0_57, %c0_58] : memref<1x8x128xf32, #tpu.memory_space<vmem>>, vector<1x8x128xf32>
    %110 = vector.shape_cast %109 : vector<1x8x128xf32> to vector<8x128xf32>
    %111 = vector.shape_cast %108 : vector<8x128xf32> to vector<1x8x128xf32>
    tpu.vector_store %arg5[%c0_56, %c0_57, %c0_58], %111 {strides = array<i32>} : memref<1x8x128xf32, #tpu.memory_space<vmem>>, vector<1x8x128xf32>,
    return
  }
  func.func @transform_0(%arg0: i32) -> (i32, i32, i32) {
    %c0_i32 = arith.constant 0 : i32
    %c0_i32_0 = arith.constant 0 : i32
    %c0_i32_1 = arith.constant 0 : i32
    return %arg0, %c0_i32, %c0_i32_0 : i32, i32, i32
  }
  func.func @transform_1(%arg0: i32) -> (i32, i32, i32, i32) {
    %c0_i32 = arith.constant 0 : i32
    %c0_i32_0 = arith.constant 0 : i32
    %c0_i32_1 = arith.constant 0 : i32
    %c0_i32_2 = arith.constant 0 : i32
    return %arg0, %c0_i32, %c0_i32_0, %c0_i32_1 : i32, i32, i32, i32
  }
  func.func @transform_2(%arg0: i32) -> (i32, i32, i32) {
    %c0_i32 = arith.constant 0 : i32
    %c0_i32_0 = arith.constant 0 : i32
    %c0_i32_1 = arith.constant 0 : i32
    return %arg0, %c0_i32, %c0_i32_0 : i32, i32, i32
  }
  func.func @transform_3(%arg0: i32) -> (i32, i32, i32) {
    %c0_i32 = arith.constant 0 : i32
    %c0_i32_0 = arith.constant 0 : i32
    %c0_i32_1 = arith.constant 0 : i32
    return %arg0, %c0_i32, %c0_i32_0 : i32, i32, i32
  }
  func.func @transform_4(%arg0: i32) -> (i32, i32, i32) {
    %c0_i32 = arith.constant 0 : i32
    %c0_i32_0 = arith.constant 0 : i32
    %c0_i32_1 = arith.constant 0 : i32
    return %arg0, %c0_i32, %c0_i32_0 : i32, i32, i32
  }
}

</mosaic_0001>

<llo_original>
// kernel: tpu_custom_call.1
$region0: #{tpu_custom_call.1}
  #allocation0 [shape = 'u32[]', space=smem, size = 0x4, offset = 0x4, fixed_abs, tag = 'smem constant byte address 0x4 - core index']
  #allocation1 [shape = 'u32[72,128]{1,0:T(1,128)}', space=vmem, size = 0x9000, scoped, tag = 'internal scratch']
  %s0 = inlined_call_operand.hbm [shape: f32[2,8,32], index: 0, kind: input, shape index: {}]
  %s1 = inlined_call_operand.hbm [shape: bf16[2,3,32,32], index: 1, kind: input, shape index: {}]
  %s2 = inlined_call_operand.hbm [shape: bf16[2,32,128], index: 2, kind: input, shape index: {}]
  %s3 = inlined_call_operand.hbm [shape: f32[2,8,128], index: 3, kind: input, shape index: {}]
  %s4 = inlined_call_operand.hbm [shape: f32[2,8,128], index: 4, kind: output, shape index: {}]
  %s5 = sld [smem:[#allocation0]]
  $region65: #{tpu_custom_call.1} parent=0
    _
  %s7 = ssub.s32 1, %s5
  %s8 = scalar_select 0, %s7, %s5
  $region1: #{tpu_custom_call.1} parent=0
    #allocation2 [shape = 'u8[8192]{0}', space=vmem, size = 0x2000, scoped, tag = 'input window, operand 0']
    #allocation3 [shape = 's32[2]{0}', space=sflag, size = 0x8, scoped, tag = 'scoped memory for tpu_custom_call.1']
    #allocation4 [shape = 's32[2]{0}', space=sflag, size = 0x8, scoped, tag = 'scoped memory for tpu_custom_call.1']
    #allocation5 [shape = 'u8[49152]{0}', space=vmem, size = 0xc000, scoped, tag = 'input window, operand 1']
    #allocation6 [shape = 's32[2]{0}', space=sflag, size = 0x8, scoped, tag = 'scoped memory for tpu_custom_call.1']
    #allocation7 [shape = 'u8[16384]{0}', space=vmem, size = 0x4000, scoped, tag = 'input window, operand 2']
    #allocation8 [shape = 'u8[8192]{0}', space=vmem, size = 0x2000, scoped, tag = 'input window, operand 3']
    #allocation9 [shape = 's32[2]{0}', space=sflag, size = 0x8, scoped, tag = 'scoped memory for tpu_custom_call.1']
    #allocation10 [shape = 'u8[8192]{0}', space=vmem, size = 0x2000, scoped, tag = 'output window, operand 0']
    %9 = vsyncpa [#allocation3], 0
    %s10 = scalar_lea.sflag [#allocation3], 1
    %11 = vsyncpa %s10, 0
    %12 = vsyncpa [#allocation6], 0
    %s13 = scalar_lea.sflag [#allocation6], 1
    %14 = vsyncpa %s13, 0
    %15 = vsyncpa [#allocation9], 0
    %s16 = scalar_lea.sflag [#allocation9], 1
    %17 = vsyncpa %s16, 0
    %18 = vsyncpa [#allocation4], 0
    %s19 = scalar_lea.sflag [#allocation4], 1
    %20 = vsyncpa %s19, 0
    loop: start=0, step=1, limit=4
    $region2: #{tpu_custom_call.1} parent=1 // loop_pre_header
      _
    $region3: #{tpu_custom_call.1} parent=1 // loop_header
      %s22 = sphi 0, %s26
      %p23 = scmp.ge.s32.totalorder %s22, 4
      %s32 = sphi 0, %s34
      %s35 = sphi 0, %s32
      %s36 = sphi 0, %s35
      %s52 = sphi 0, %s36
      %s58 = sphi 0, %s60
      %s61 = sphi 0, %s58
      %s62 = sphi 0, %s61
      %s78 = sphi 0, %s62
      %s84 = sphi 0, %s86
      %s87 = sphi 0, %s84
      %s88 = sphi 0, %s87
      %s104 = sphi 0, %s88
      %s110 = sphi 0, %s112
      %s113 = sphi 0, %s110
      %s114 = sphi 0, %s113
      %s130 = sphi 0, %s114
      %s136 = sphi 0, %s138
      %s139 = sphi 0, %s136
      %s140 = sphi 0, %s139
      %s156 = sphi 0, %s140
    $region4: #{tpu_custom_call.1} parent=1 // loop_header_branch
      %25 = sbr.rel (%p23) target = $region8
    $region5: #{tpu_custom_call.1} parent=1 // loop_body
      %s27 = ssub.s32 %s22, 1
      %s28 = ssub.s32 %s22, 2
      %s29 = sadd.s32 %s22, 1
      %s30 = ssub.s32 %s22, %s29
      %p31 = scmp.eq.s32.totalorder %s30, 0
      %s33 = sadd.s32 %s32, 1
      %s34 = scalar_select %p31, %s32, %s33
      %p37 = pneg %p31
      %p38 = scmp.eq.s32.totalorder %s22, 1
      %p39 = por %p37, %p38
      %p40 = scmp.ne.s32.totalorder %s32, %s35
      %p41 = scmp.eq.s32.totalorder %s22, 0
      %p42 = por %p40, %p41
      %p43 = scmp.ne.s32.totalorder %s32, %s35
      %p44 = scmp.eq.s32.totalorder %s27, 1
      %p45 = por %p43, %p44
      %p46 = scmp.ne.s32.totalorder %s35, %s36
      %p47 = scmp.eq.s32.totalorder %s27, 0
      %p48 = por %p46, %p47
      %p49 = scmp.ne.s32.totalorder %s35, %s36
      %p50 = scmp.eq.s32.totalorder %s28, 1
      %p51 = por %p49, %p50
      %p53 = scmp.ne.s32.totalorder %s36, %s52
      %p54 = scmp.eq.s32.totalorder %s28, 0
      %p55 = por %p53, %p54
      %s56 = ssub.s32 %s22, %s29
      %p57 = scmp.eq.s32.totalorder %s56, 0
      %s59 = sadd.s32 %s58, 1
      %s60 = scalar_select %p57, %s58, %s59
      %p63 = pneg %p57
      %p64 = scmp.eq.s32.totalorder %s22, 1
      %p65 = por %p63, %p64
      %p66 = scmp.ne.s32.totalorder %s58, %s61
      %p67 = scmp.eq.s32.totalorder %s22, 0
      %p68 = por %p66, %p67
      %p69 = scmp.ne.s32.totalorder %s58, %s61
      %p70 = scmp.eq.s32.totalorder %s27, 1
      %p71 = por %p69, %p70
      %p72 = scmp.ne.s32.totalorder %s61, %s62
      %p73 = scmp.eq.s32.totalorder %s27, 0
      %p74 = por %p72, %p73
      %p75 = scmp.ne.s32.totalorder %s61, %s62
      %p76 = scmp.eq.s32.totalorder %s28, 1
      %p77 = por %p75, %p76
      %p79 = scmp.ne.s32.totalorder %s62, %s78
      %p80 = scmp.eq.s32.totalorder %s28, 0
      %p81 = por %p79, %p80
      %s82 = ssub.s32 %s22, %s29
      %p83 = scmp.eq.s32.totalorder %s82, 0
      %s85 = sadd.s32 %s84, 1
      %s86 = scalar_select %p83, %s84, %s85
      %p89 = pneg %p83
      %p90 = scmp.eq.s32.totalorder %s22, 1
      %p91 = por %p89, %p90
      %p92 = scmp.ne.s32.totalorder %s84, %s87
      %p93 = scmp.eq.s32.totalorder %s22, 0
      %p94 = por %p92, %p93
      %p95 = scmp.ne.s32.totalorder %s84, %s87
      %p96 = scmp.eq.s32.totalorder %s27, 1
      %p97 = por %p95, %p96
      %p98 = scmp.ne.s32.totalorder %s87, %s88
      %p99 = scmp.eq.s32.totalorder %s27, 0
      %p100 = por %p98, %p99
      %p101 = scmp.ne.s32.totalorder %s87, %s88
      %p102 = scmp.eq.s32.totalorder %s28, 1
      %p103 = por %p101, %p102
      %p105 = scmp.ne.s32.totalorder %s88, %s104
      %p106 = scmp.eq.s32.totalorder %s28, 0
      %p107 = por %p105, %p106
      %s108 = ssub.s32 %s22, %s29
      %p109 = scmp.eq.s32.totalorder %s108, 0
      %s111 = sadd.s32 %s110, 1
      %s112 = scalar_select %p109, %s110, %s111
      %p115 = pneg %p109
      %p116 = scmp.eq.s32.totalorder %s22, 1
      %p117 = por %p115, %p116
      %p118 = scmp.ne.s32.totalorder %s110, %s113
      %p119 = scmp.eq.s32.totalorder %s22, 0
      %p120 = por %p118, %p119
      %p121 = scmp.ne.s32.totalorder %s110, %s113
      %p122 = scmp.eq.s32.totalorder %s27, 1
      %p123 = por %p121, %p122
      %p124 = scmp.ne.s32.totalorder %s113, %s114
      %p125 = scmp.eq.s32.totalorder %s27, 0
      %p126 = por %p124, %p125
      %p127 = scmp.ne.s32.totalorder %s113, %s114
      %p128 = scmp.eq.s32.totalorder %s28, 1
      %p129 = por %p127, %p128
      %p131 = scmp.ne.s32.totalorder %s114, %s130
      %p132 = scmp.eq.s32.totalorder %s28, 0
      %p133 = por %p131, %p132
      %s134 = ssub.s32 %s22, %s29
      %p135 = scmp.eq.s32.totalorder %s134, 0
      %s137 = sadd.s32 %s136, 1
      %s138 = scalar_select %p135, %s136, %s137
      %p141 = pneg %p135
      %p142 = scmp.eq.s32.totalorder %s22, 1
      %p143 = por %p141, %p142
      %p144 = scmp.ne.s32.totalorder %s136, %s139
      %p145 = scmp.eq.s32.totalorder %s22, 0
      %p146 = por %p144, %p145
      %p147 = scmp.ne.s32.totalorder %s136, %s139
      %p148 = scmp.eq.s32.totalorder %s27, 1
      %p149 = por %p147, %p148
      %p150 = scmp.ne.s32.totalorder %s139, %s140
      %p151 = scmp.eq.s32.totalorder %s27, 0
      %p152 = por %p150, %p151
      %p153 = scmp.ne.s32.totalorder %s139, %s140
      %p154 = scmp.eq.s32.totalorder %s28, 1
      %p155 = por %p153, %p154
      %p157 = scmp.ne.s32.totalorder %s140, %s156
      %p158 = scmp.eq.s32.totalorder %s28, 0
      %p159 = por %p157, %p158
      %p160 = scmp.le.s32.totalorder 1, %s22
      %p161 = scmp.lt.s32.totalorder %s22, 3
      %p162 = pnand %p160, %p161
      %p163 = pneg %p162
      // Predicated region
      $region9: #{tpu_custom_call.1} parent=5 // pred_check
        _
      $region10: #{tpu_custom_call.1} parent=5 // pred_check_branch
        %165 = sbr.rel (%p162) target = $region12
      $region11: #{tpu_custom_call.1} parent=5 // pred_region
        %s166 = ssub.s32 %s22, 1
      $region12: #{tpu_custom_call.1} parent=5 // pred_fallthru
        _
      %p167 = scmp.lt.s32.totalorder %s22, 2
      // Predicated region
      $region13: #{tpu_custom_call.1} parent=5 // pred_check
        %p168 = pneg %p167
      $region14: #{tpu_custom_call.1} parent=5 // pred_check_branch
        %170 = sbr.rel (%p168) target = $region16
      $region15: #{tpu_custom_call.1} parent=5 // pred_region
        // Predicated region
        $region17: #{tpu_custom_call.1} parent=15 // pred_check
          %p171 = pneg %p42
        $region18: #{tpu_custom_call.1} parent=15 // pred_check_branch
          %173 = sbr.rel (%p171) target = $region20
        $region19: #{tpu_custom_call.1} parent=15 // pred_region
          %s174 = sand.u32 %s32, 1
          %s175 = scalar_lea.sflag [#allocation3], %s174
          %s176 = sand.u32 %s32, 1
          %s177 = smul.addr %s176, 8
          %s178 = scalar_lea.vmem [#allocation2], %s177
          %180 = vsyncadd %s175, 0
          %s181 = smul.addr %s22, 8
          %s182 = scalar_lea.hbm %s0, %s181
          %s184 = sshll.u32 %s182, 4
          %s185 = int_to_ptr.hbm [resolvable:$true] %s184
          %s186 = sshll.u32 %s178, 4
          %s187 = int_to_ptr.vmem [resolvable:$true] %s186
          %189 = dma.hbm_to_vmem [thread:$0]  %s185, 128, %s187, %s175
        $region20: #{tpu_custom_call.1} parent=15 // pred_fallthru
          _
        // Predicated region
        $region21: #{tpu_custom_call.1} parent=15 // pred_check
          %p190 = pneg %p68
        $region22: #{tpu_custom_call.1} parent=15 // pred_check_branch
          %192 = sbr.rel (%p190) target = $region24
        $region23: #{tpu_custom_call.1} parent=15 // pred_region
          %s193 = sand.u32 %s22, 1
          %s194 = scalar_lea.sflag [#allocation6], %s193
          %s195 = sand.u32 %s58, 1
          %s196 = smul.addr %s195, 48
          %s197 = scalar_lea.vmem [#allocation5], %s196
          %199 = vsyncadd %s194, 0
          %s200 = smul.addr %s22, 12
          %s201 = smul.addr %s200, 4
          %s202 = scalar_lea.hbm %s1, %s201
          %s203 = sshll.u32 %s202, 4
          %s204 = int_to_ptr.hbm [resolvable:$true] %s203
          %s205 = sshll.u32 %s197, 4
          %s206 = int_to_ptr.vmem [resolvable:$true] %s205
          %211 = dma.hbm_to_vmem [thread:$0]  %s204, 768, %s206, %s194, 64, 64, 4
        $region24: #{tpu_custom_call.1} parent=15 // pred_fallthru
          _
        // Predicated region
        $region25: #{tpu_custom_call.1} parent=15 // pred_check
          %p212 = pneg %p94
        $region26: #{tpu_custom_call.1} parent=15 // pred_check_branch
          %214 = sbr.rel (%p212) target = $region28
        $region27: #{tpu_custom_call.1} parent=15 // pred_region
          %s215 = sand.u32 %s22, 1
          %s216 = scalar_lea.sflag [#allocation6], %s215
          %s217 = sand.u32 %s84, 1
          %s218 = smul.addr %s217, 16
          %s219 = scalar_lea.vmem [#allocation7], %s218
          %221 = vsyncadd %s216, 0
          %s222 = smul.addr %s22, 4
          %s223 = smul.addr %s222, 4
          %s224 = scalar_lea.hbm %s2, %s223
          %s225 = sshll.u32 %s224, 4
          %s226 = int_to_ptr.hbm [resolvable:$true] %s225
          %s227 = sshll.u32 %s219, 4
          %s228 = int_to_ptr.vmem [resolvable:$true] %s227
          %233 = dma.hbm_to_vmem [thread:$0]  %s226, 256, %s228, %s216, 64, 64, 4
        $region28: #{tpu_custom_call.1} parent=15 // pred_fallthru
          _
        // Predicated region
        $region29: #{tpu_custom_call.1} parent=15 // pred_check
          %p234 = pneg %p120
        $region30: #{tpu_custom_call.1} parent=15 // pred_check_branch
          %236 = sbr.rel (%p234) target = $region32
        $region31: #{tpu_custom_call.1} parent=15 // pred_region
          %s237 = sand.u32 %s110, 1
          %s238 = scalar_lea.sflag [#allocation9], %s237
          %s239 = sand.u32 %s110, 1
          %s240 = smul.addr %s239, 8
          %s241 = scalar_lea.vmem [#allocation8], %s240
          %243 = vsyncadd %s238, 0
          %s244 = smul.addr %s22, 8
          %s245 = scalar_lea.hbm %s3, %s244
          %s247 = sshll.u32 %s245, 4
          %s248 = int_to_ptr.hbm [resolvable:$true] %s247
          %s249 = sshll.u32 %s241, 4
          %s250 = int_to_ptr.vmem [resolvable:$true] %s249
          %252 = dma.hbm_to_vmem [thread:$0]  %s248, 128, %s250, %s238
        $region32: #{tpu_custom_call.1} parent=15 // pred_fallthru
          _
      $region16: #{tpu_custom_call.1} parent=5 // pred_fallthru
        _
      %p253 = scmp.le.s32.totalorder 1, %s22
      %p254 = scmp.lt.s32.totalorder %s22, 3
      %p255 = pnand %p253, %p254
      %p256 = pneg %p255
      // Predicated region
      $region33: #{tpu_custom_call.1} parent=5 // pred_check
        _
      $region34: #{tpu_custom_call.1} parent=5 // pred_check_branch
        %258 = sbr.rel (%p255) target = $region36
      $region35: #{tpu_custom_call.1} parent=5 // pred_region
        %s259 = ssub.s32 %s22, 1
        %s260 = sand.u32 %s35, 1
        %s261 = scalar_lea.sflag [#allocation3], %s260
        %s262 = sand.u32 %s35, 1
        %s263 = smul.addr %s262, 8
        %s264 = scalar_lea.vmem [#allocation2], %s263
        // Predicated region
        $region37: #{tpu_custom_call.1} parent=35 // pred_check
          %p265 = pneg %p48
        $region38: #{tpu_custom_call.1} parent=35 // pred_check_branch
          %267 = sbr.rel (%p265) target = $region40
        $region39: #{tpu_custom_call.1} parent=35 // pred_region
          %269 = dma.done %s261, 128
        $region40: #{tpu_custom_call.1} parent=35 // pred_fallthru
          _
        %s270 = sand.u32 %s27, 1
        %s271 = scalar_lea.sflag [#allocation6], %s270
        %s272 = sand.u32 %s61, 1
        %s273 = smul.addr %s272, 48
        %s274 = scalar_lea.vmem [#allocation5], %s273
        // Predicated region
        $region41: #{tpu_custom_call.1} parent=35 // pred_check
          %p275 = pneg %p74
        $region42: #{tpu_custom_call.1} parent=35 // pred_check_branch
          %277 = sbr.rel (%p275) target = $region44
        $region43: #{tpu_custom_call.1} parent=35 // pred_region
          %279 = dma.done %s271, 768
        $region44: #{tpu_custom_call.1} parent=35 // pred_fallthru
          _
        %s280 = sand.u32 %s27, 1
        %s281 = scalar_lea.sflag [#allocation6], %s280
        %s282 = sand.u32 %s87, 1
        %s283 = smul.addr %s282, 16
        %s284 = scalar_lea.vmem [#allocation7], %s283
        // Predicated region
        $region45: #{tpu_custom_call.1} parent=35 // pred_check
          %p285 = pneg %p100
        $region46: #{tpu_custom_call.1} parent=35 // pred_check_branch
          %287 = sbr.rel (%p285) target = $region48
        $region47: #{tpu_custom_call.1} parent=35 // pred_region
          %289 = dma.done %s281, 256
        $region48: #{tpu_custom_call.1} parent=35 // pred_fallthru
          _
        %s290 = sand.u32 %s113, 1
        %s291 = scalar_lea.sflag [#allocation9], %s290
        %s292 = sand.u32 %s113, 1
        %s293 = smul.addr %s292, 8
        %s294 = scalar_lea.vmem [#allocation8], %s293
        // Predicated region
        $region49: #{tpu_custom_call.1} parent=35 // pred_check
          %p295 = pneg %p126
        $region50: #{tpu_custom_call.1} parent=35 // pred_check_branch
          %297 = sbr.rel (%p295) target = $region52
        $region51: #{tpu_custom_call.1} parent=35 // pred_region
          %299 = dma.done %s291, 128
        $region52: #{tpu_custom_call.1} parent=35 // pred_fallthru
          _
        %s300 = sand.u32 %s35, 1
        %s301 = scalar_lea.sflag [#allocation3], %s300
        %s302 = sand.u32 %s35, 1
        %s303 = smul.addr %s302, 8
        %s304 = scalar_lea.vmem [#allocation2], %s303
        %p305 = pneg %p48
        %p306 = pneg %p45
        %s307 = sand.u32 %s27, 1
        %s308 = scalar_lea.sflag [#allocation6], %s307
        %s309 = sand.u32 %s61, 1
        %s310 = smul.addr %s309, 48
        %s311 = scalar_lea.vmem [#allocation5], %s310
        %p312 = pneg %p74
        %p313 = pneg %p71
        %s314 = sand.u32 %s27, 1
        %s315 = scalar_lea.sflag [#allocation6], %s314
        %s316 = sand.u32 %s87, 1
        %s317 = smul.addr %s316, 16
        %s318 = scalar_lea.vmem [#allocation7], %s317
        %p319 = pneg %p100
        %p320 = pneg %p97
        %s321 = sand.u32 %s113, 1
        %s322 = scalar_lea.sflag [#allocation9], %s321
        %s323 = sand.u32 %s113, 1
        %s324 = smul.addr %s323, 8
        %s325 = scalar_lea.vmem [#allocation8], %s324
        %p326 = pneg %p126
        %p327 = pneg %p123
        %p328 = pneg %p152
        %p329 = pneg %p149
        %s330 = sand.u32 %s139, 1
        %s331 = scalar_lea.sflag [#allocation4], %s330
        %s332 = sand.u32 %s139, 1
        %s333 = smul.addr %s332, 8
        %s334 = scalar_lea.vmem [#allocation10], %s333
        %v336 = vld [vmem:[%s264] sm:$0xff]
        %v337 = vpack.c.bf16 %v336, %v336
        %v338 = vld [vmem:[%s274] sm:$0xf]
        %v339 = vld [vmem:[%s274 + $0x4] sm:$0xf]
        %v340 = vld [vmem:[%s274 + $0x8] sm:$0xf]
        %v341 = vld [vmem:[%s274 + $0xc] sm:$0xf]
        %v346 = vunpack.c.l.b16 %v338
        %v347 = vunpack.c.l.b16 %v339
        %v348 = vunpack.c.l.b16 %v340
        %v349 = vunpack.c.l.b16 %v341
        %v350 = vpack.c.b16 %v347, %v346
        %v351 = vpack.c.b16 %v349, %v348
        %vm354 = vcmask 261120
        %v356 = vsel %vm354, %v337, 0
        %358 = vmatpush.bf16.msra.mxu0 0
        %359 = vmatpush.bf16.msra.mxu0 0
        %360 = vmatpush.bf16.msra.mxu0 0
        %361 = vmatpush.bf16.msra.mxu0 0
        %362 = vmatpush.bf16.msra.mxu0 0
        %363 = vmatpush.bf16.msra.mxu0 0
        %364 = vmatpush.bf16.msra.mxu0 %v351
        %365 = vmatpush.bf16.msra.mxu0 %v350
        %366 = vmatmul.bf16.gmra.mxu0 %v356
        %v367 = vpop.f32.mrf.mxu0
        %v368 = vadd.f32 0.0, %v367
        %v369 = vpop.f32.mrf.mxu0
        %370 = vdwg.mxu0
        %v371 = vsel %vm354, %v368, 0.0
        %v372 = vrot.slane %v371, 4
        %v373 = vadd.f32 %v371, %v372
        %v374 = vrot.slane %v373, 2
        %v375 = vadd.f32 %v373, %v374
        %v376 = vrot.slane %v375, 1
        %v377 = vadd.f32 %v375, %v376
        %v378 = vrcp.pop 8.0
        %v379 = vmul.f32 8.0, %v378
        %v380 = vsub.f32 1.0, %v379
        %v381 = vmul.f32 %v378, %v380
        %v382 = vadd.f32 %v378, %v381
        %vm383 = vweird.f32 %v378
        %v384 = vsel %vm383, %v378, %v382
        %v385 = vmul.f32 %v377, %v384
        %v386 = vmul.f32 %v368, %v368
        %v387 = vsel %vm354, %v386, 0.0
        %v388 = vrot.slane %v387, 4
        %v389 = vadd.f32 %v387, %v388
        %v390 = vrot.slane %v389, 2
        %v391 = vadd.f32 %v389, %v390
        %v392 = vrot.slane %v391, 1
        %v393 = vadd.f32 %v391, %v392
        %v394 = vmul.f32 %v393, %v384
        %v395 = vmul.f32 %v385, %v385
        %v396 = vsub.f32 %v394, %v395
        %v397 = vmax.f32 %v396, 0.0
        %v398 = vld [vmem:[%s294] sm:$0x1]
        %v399 = vld [vmem:[%s294 + $0x1] sm:$0x1]
        %v400 = vadd.f32 %v397, 1e-05
        %v401 = vrsqrt.pop %v400
        %v402 = vmul.f32 %v401, %v400
        %v403 = vmul.f32 %v402, %v401
        %v404 = vmul.f32 0.5, %v403
        %v405 = vsub.f32 1.5, %v404
        %v406 = vmul.f32 %v401, %v405
        %vm407 = vweird.f32 %v400
        %vm408 = vweird.f32 %v401
        %vm409 = vmor %vm407, %vm408
        %v410 = vsel %vm409, %v401, %v406
        %v411 = vmul.f32 %v398, %v410
        %v412 = vmul.f32 %v385, %v411
        %v413 = vsub.f32 %v399, %v412
        %v414 = vperm.slane %v411, 0
        %v415 = vmul.f32 %v368, %v414
        %v416 = vperm.slane %v413, 0
        %v417 = vadd.f32 %v415, %v416
        %v418 = vmax.f32 %v417, 0.0
        %v419 = vpack.c.bf16 %v418, %v418
        %s420 = scalar_lea.vmem %s274, 16 [#allocation5]
        %v421 = vld [vmem:[%s420] sm:$0xf]
        %v422 = vld [vmem:[%s420 + $0x4] sm:$0xf]
        %v423 = vld [vmem:[%s420 + $0x8] sm:$0xf]
        %v424 = vld [vmem:[%s420 + $0xc] sm:$0xf]
        %v429 = vunpack.c.l.b16 %v421
        %v430 = vunpack.c.l.b16 %v422
        %v431 = vunpack.c.l.b16 %v423
        %v432 = vunpack.c.l.b16 %v424
        %v433 = vpack.c.b16 %v430, %v429
        %v434 = vpack.c.b16 %v432, %v431
        %v438 = vsel %vm354, %v419, 0
        %440 = vmatpush.bf16.msra.mxu0 0
        %441 = vmatpush.bf16.msra.mxu0 0
        %442 = vmatpush.bf16.msra.mxu0 0
        %443 = vmatpush.bf16.msra.mxu0 0
        %444 = vmatpush.bf16.msra.mxu0 0
        %445 = vmatpush.bf16.msra.mxu0 0
        %446 = vmatpush.bf16.msra.mxu0 %v434
        %447 = vmatpush.bf16.msra.mxu0 %v433
        %448 = vmatmul.bf16.gmra.mxu0 %v438
        %v449 = vpop.f32.mrf.mxu0
        %v450 = vadd.f32 0.0, %v449
        %v451 = vpop.f32.mrf.mxu0
        %452 = vdwg.mxu0
        %v453 = vsel %vm354, %v450, 0.0
        %v454 = vrot.slane %v453, 4
        %v455 = vadd.f32 %v453, %v454
        %v456 = vrot.slane %v455, 2
        %v457 = vadd.f32 %v455, %v456
        %v458 = vrot.slane %v457, 1
        %v459 = vadd.f32 %v457, %v458
        %v460 = vmul.f32 %v459, %v384
        %v461 = vmul.f32 %v450, %v450
        %v462 = vsel %vm354, %v461, 0.0
        %v463 = vrot.slane %v462, 4
        %v464 = vadd.f32 %v462, %v463
        %v465 = vrot.slane %v464, 2
        %v466 = vadd.f32 %v464, %v465
        %v467 = vrot.slane %v466, 1
        %v468 = vadd.f32 %v466, %v467
        %v469 = vmul.f32 %v468, %v384
        %v470 = vmul.f32 %v460, %v460
        %v471 = vsub.f32 %v469, %v470
        %v472 = vmax.f32 %v471, 0.0
        %v473 = vld [vmem:[%s294 + $0x2] sm:$0x1]
        %v474 = vld [vmem:[%s294 + $0x3] sm:$0x1]
        %v475 = vadd.f32 %v472, 1e-05
        %v476 = vrsqrt.pop %v475
        %v477 = vmul.f32 %v476, %v475
        %v478 = vmul.f32 %v477, %v476
        %v479 = vmul.f32 0.5, %v478
        %v480 = vsub.f32 1.5, %v479
        %v481 = vmul.f32 %v476, %v480
        %vm482 = vweird.f32 %v475
        %vm483 = vweird.f32 %v476
        %vm484 = vmor %vm482, %vm483
        %v485 = vsel %vm484, %v476, %v481
        %v486 = vmul.f32 %v473, %v485
        %v487 = vmul.f32 %v460, %v486
        %v488 = vsub.f32 %v474, %v487
        %v489 = vperm.slane %v486, 0
        %v490 = vmul.f32 %v450, %v489
        %v491 = vperm.slane %v488, 0
        %v492 = vadd.f32 %v490, %v491
        %v493 = vmax.f32 %v492, 0.0
        %v494 = vpack.c.bf16 %v493, %v493
        %s495 = scalar_lea.vmem %s274, 32 [#allocation5]
        %v496 = vld [vmem:[%s495] sm:$0xf]
        %v497 = vld [vmem:[%s495 + $0x4] sm:$0xf]
        %v498 = vld [vmem:[%s495 + $0x8] sm:$0xf]
        %v499 = vld [vmem:[%s495 + $0xc] sm:$0xf]
        %v504 = vunpack.c.l.b16 %v496
        %v505 = vunpack.c.l.b16 %v497
        %v506 = vunpack.c.l.b16 %v498
        %v507 = vunpack.c.l.b16 %v499
        %v508 = vpack.c.b16 %v505, %v504
        %v509 = vpack.c.b16 %v507, %v506
        %v513 = vsel %vm354, %v494, 0
        %515 = vmatpush.bf16.msra.mxu0 0
        %516 = vmatpush.bf16.msra.mxu0 0
        %517 = vmatpush.bf16.msra.mxu0 0
        %518 = vmatpush.bf16.msra.mxu0 0
        %519 = vmatpush.bf16.msra.mxu0 0
        %520 = vmatpush.bf16.msra.mxu0 0
        %521 = vmatpush.bf16.msra.mxu0 %v509
        %522 = vmatpush.bf16.msra.mxu0 %v508
        %523 = vmatmul.bf16.gmra.mxu0 %v513
        %v524 = vpop.f32.mrf.mxu0
        %v525 = vadd.f32 0.0, %v524
        %v526 = vpop.f32.mrf.mxu0
        %527 = vdwg.mxu0
        %v528 = vsel %vm354, %v525, 0.0
        %v529 = vrot.slane %v528, 4
        %v530 = vadd.f32 %v528, %v529
        %v531 = vrot.slane %v530, 2
        %v532 = vadd.f32 %v530, %v531
        %v533 = vrot.slane %v532, 1
        %v534 = vadd.f32 %v532, %v533
        %v535 = vmul.f32 %v534, %v384
        %v536 = vmul.f32 %v525, %v525
        %v537 = vsel %vm354, %v536, 0.0
        %v538 = vrot.slane %v537, 4
        %v539 = vadd.f32 %v537, %v538
        %v540 = vrot.slane %v539, 2
        %v541 = vadd.f32 %v539, %v540
        %v542 = vrot.slane %v541, 1
        %v543 = vadd.f32 %v541, %v542
        %v544 = vmul.f32 %v543, %v384
        %v545 = vmul.f32 %v535, %v535
        %v546 = vsub.f32 %v544, %v545
        %v547 = vmax.f32 %v546, 0.0
        %v548 = vld [vmem:[%s294 + $0x4] sm:$0x1]
        %v549 = vld [vmem:[%s294 + $0x5] sm:$0x1]
        %v550 = vadd.f32 %v547, 1e-05
        %v551 = vrsqrt.pop %v550
        %v552 = vmul.f32 %v551, %v550
        %v553 = vmul.f32 %v552, %v551
        %v554 = vmul.f32 0.5, %v553
        %v555 = vsub.f32 1.5, %v554
        %v556 = vmul.f32 %v551, %v555
        %vm557 = vweird.f32 %v550
        %vm558 = vweird.f32 %v551
        %vm559 = vmor %vm557, %vm558
        %v560 = vsel %vm559, %v551, %v556
        %v561 = vmul.f32 %v548, %v560
        %v562 = vmul.f32 %v535, %v561
        %v563 = vsub.f32 %v549, %v562
        %v564 = vperm.slane %v561, 0
        %v565 = vmul.f32 %v525, %v564
        %v566 = vperm.slane %v563, 0
        %v567 = vadd.f32 %v565, %v566
        %v568 = vmax.f32 %v567, 0.0
        %v569 = vld [vmem:[%s294 + $0x6] sm:$0x1]
        %v570 = vpack.c.bf16 %v568, %v568
        %v571 = vld [vmem:[%s284] sm:$0xf]
        %v572 = vld [vmem:[%s284 + $0x4] sm:$0xf]
        %v573 = vld [vmem:[%s284 + $0x8] sm:$0xf]
        %v574 = vld [vmem:[%s284 + $0xc] sm:$0xf]
        %v575 = vperm.slane %v569, 0
        %v580 = vunpack.c.l.b16 %v571
        %v581 = vunpack.c.l.b16 %v572
        %v582 = vunpack.c.l.b16 %v573
        %v583 = vunpack.c.l.b16 %v574
        %v584 = vpack.c.b16 %v581, %v580
        %v585 = vpack.c.b16 %v583, %v582
        %v589 = vsel %vm354, %v570, 0
        %591 = vmatpush.bf16.msra.mxu0 0
        %592 = vmatpush.bf16.msra.mxu0 0
        %593 = vmatpush.bf16.msra.mxu0 0
        %594 = vmatpush.bf16.msra.mxu0 0
        %595 = vmatpush.bf16.msra.mxu0 0
        %596 = vmatpush.bf16.msra.mxu0 0
        %597 = vmatpush.bf16.msra.mxu0 %v585
        %598 = vmatpush.bf16.msra.mxu0 %v584
        %599 = vmatmul.bf16.gmra.mxu0 %v589
        %v600 = vpop.f32.mrf.mxu0
        %v601 = vadd.f32 %v575, %v600
        %v602 = vpop.f32.mrf.mxu0
        %603 = vdwg.mxu0
        %604 = vst [vmem:[%s334] sm:$0xff] %v601
        %s605 = sand.u32 %s139, 1
        %s606 = scalar_lea.sflag [#allocation4], %s605
        %s607 = sand.u32 %s139, 1
        %s608 = smul.addr %s607, 8
        %s609 = scalar_lea.vmem [#allocation10], %s608
        // Predicated region
        $region53: #{tpu_custom_call.1} parent=35 // pred_check
          %p610 = pneg %p149
        $region54: #{tpu_custom_call.1} parent=35 // pred_check_branch
          %612 = sbr.rel (%p610) target = $region56
        $region55: #{tpu_custom_call.1} parent=35 // pred_region
          %614 = vsyncadd %s606, 0
          %s615 = smul.addr %s27, 8
          %s616 = scalar_lea.hbm %s4, %s615
          %s618 = sshll.u32 %s609, 4
          %s619 = int_to_ptr.vmem [resolvable:$true] %s618
          %s620 = sshll.u32 %s616, 4
          %s621 = int_to_ptr.hbm [resolvable:$true] %s620
          %623 = dma.vmem_to_hbm [thread:$0]  %s619, 128, %s621, %s606
        $region56: #{tpu_custom_call.1} parent=35 // pred_fallthru
          _
      $region36: #{tpu_custom_call.1} parent=5 // pred_fallthru
        _
      %p624 = scmp.le.s32.totalorder 2, %s22
      // Predicated region
      $region57: #{tpu_custom_call.1} parent=5 // pred_check
        %p625 = pneg %p624
      $region58: #{tpu_custom_call.1} parent=5 // pred_check_branch
        %627 = sbr.rel (%p625) target = $region60
      $region59: #{tpu_custom_call.1} parent=5 // pred_region
        %s628 = ssub.s32 %s22, 2
        // Predicated region
        $region61: #{tpu_custom_call.1} parent=59 // pred_check
          %p629 = pneg %p155
        $region62: #{tpu_custom_call.1} parent=59 // pred_check_branch
          %631 = sbr.rel (%p629) target = $region64
        $region63: #{tpu_custom_call.1} parent=59 // pred_region
          %s632 = sand.u32 %s140, 1
          %s633 = scalar_lea.sflag [#allocation4], %s632
          %s634 = sand.u32 %s140, 1
          %s635 = smul.addr %s634, 8
          %s636 = scalar_lea.vmem [#allocation10], %s635
          %638 = dma.done %s633, 128
        $region64: #{tpu_custom_call.1} parent=59 // pred_fallthru
          _
      $region60: #{tpu_custom_call.1} parent=5 // pred_fallthru
        _
    $region6: #{tpu_custom_call.1} parent=1 // loop_footer
      %s26 = sadd.s32 1, %s22
    $region7: #{tpu_custom_call.1} parent=1 // loop_footer_branch
      %21 = sbr.rel target = $region3
    $region8: #{tpu_custom_call.1} parent=1 // loop_exit
      _
    %639 = vsyncpa [#allocation3], 1
    %s640 = scalar_lea.sflag [#allocation3], 1
    %641 = vsyncpa %s640, 1
    %642 = vsyncpa [#allocation6], 1
    %s643 = scalar_lea.sflag [#allocation6], 1
    %644 = vsyncpa %s643, 1
    %645 = vsyncpa [#allocation9], 1
    %s646 = scalar_lea.sflag [#allocation9], 1
    %647 = vsyncpa %s646, 1
    %648 = vsyncpa [#allocation4], 1
    %s649 = scalar_lea.sflag [#allocation4], 1
    %650 = vsyncpa %s649, 1

</llo_original>
